<compile_context>
chip_gen: v5e
topology: v5e:2x2
jax: 0.10.0
libtpu: 0.0.40
codegen_flags: <defaults>
</compile_context>

<pallas_src>
import functools

import jax
import jax.numpy as jnp
from jax.experimental import pallas as pl
from jax.experimental.pallas import tpu as pltpu


def _round_up(n, m):
    return ((n + m - 1) // m) * m


def _choose_tiling(B, HW, max_rows=1024):
    """Pick (bt, tile_rows): batch elements / spatial rows per grid step.

    Targets ~max_rows conv-matmul rows per step while keeping every block
    shape legal: tile_rows is either the full HW or a sublane-aligned
    (multiple-of-8) divisor of HW; bt divides B.
    """
    if HW <= max_rows or HW % 8 != 0:
        tile_rows = HW
    else:
        tile_rows = HW
        for d in range(max_rows - max_rows % 8, 7, -8):
            if HW % d == 0:
                tile_rows = d
                break
    bt = 1
    for d in range(B, 0, -1):
        if B % d == 0 and d * tile_rows <= max(max_rows, tile_rows):
            bt = d
            break
    return bt, tile_rows


def _timm_fused_kernel(patches_ref, wconv_ref, bconv_ref, wlin_ref, blin_ref,
                       out_ref, pooled_acc_ref, *, inv_hw, bt):
    """Per grid step (b, t): conv tiles (matmul) + bias + ReLU, accumulate
    global-average-pool sums; on the last row tile run the linear head.

    patches_ref    : [bt, T, CKKp]  bf16  (row tile of bt batch elements)
    wconv_ref      : [CKKp, Fp]     bf16
    bconv_ref      : [1, Fp]        f32
    wlin_ref       : [Fp, NCp]      bf16
    blin_ref       : [1, NCp]       f32
    out_ref        : [1, bt, NCp]   f32   (per-batch logits, written on last t)
    pooled_acc_ref : [bt, Fp]       f32   scratch (pool numerator accumulator)
    """
    t = pl.program_id(1)

    @pl.when(t == 0)
    def _init():
        pooled_acc_ref[...] = jnp.zeros_like(pooled_acc_ref)

    # Conv tiles on the MXU (bf16 inputs, f32 accumulation); the bias add +
    # ReLU (VPU) and the pooling column-sum (XLU) are fused into the same
    # pass.  The bt loop is a small static unroll; total MXU work equals a
    # single [bt*T, CKKp] x [CKKp, Fp] matmul.
    rows = []
    for i in range(bt):
        p_i = patches_ref[i]                                        # [T, CKKp]
        conv = jnp.dot(p_i, wconv_ref[...],
                       preferred_element_type=jnp.float32)          # [T, Fp]
        conv = jnp.maximum(conv + bconv_ref[...], 0.0)
        rows.append(jnp.sum(conv, axis=0, keepdims=True))           # [1, Fp]
    tile_sums = rows[0] if bt == 1 else jnp.concatenate(rows, axis=0)
    pooled_acc_ref[...] += tile_sums                                 # [bt, Fp]

    # Finalize once per batch tile: mean + classification head.
    @pl.when(t == pl.num_programs(1) - 1)
    def _finalize():
        pooled = pooled_acc_ref[...] * inv_hw                        # [bt, Fp]
        logits = jnp.dot(pooled.astype(jnp.bfloat16), wlin_ref[...],
                         preferred_element_type=jnp.float32) + blin_ref[...]
        out_ref[...] = logits[None]                                  # [1,bt,NCp]


def timm_model_forward(x_nchw, params):
    """x_nchw: [B, C, H, W] float32. Returns logits [B, num_classes]."""
    B, C, H, W = x_nchw.shape
    w_conv = params["conv_w"]      # [F, C, 3, 3]  (PyTorch Conv2d layout)
    b_conv = params["conv_b"]      # [F]
    w_lin = params["lin_w"]        # [num_classes, F] (PyTorch Linear layout)
    b_lin = params["lin_b"]        # [num_classes]
    feat = w_conv.shape[0]
    num_classes = w_lin.shape[0]
    KH = KW = 3
    HW = H * W
    CKK = C * KH * KW

    # Lane-dense padded sizes (multiples of 128 on all lane axes).
    CKKp = _round_up(CKK, 128)
    Fp = _round_up(feat, 128)
    NCp = _round_up(num_classes, 128)

    bt, tile_rows = _choose_tiling(B, HW)
    n_bt = B // bt
    n_rt = HW // tile_rows

    # ---- glue: im2col (pad=1, stride=1), feature axis last ----
    # TODO(synk): at real encoder resolutions this 9x patch slab should be
    # built inside the kernel (shifted taps / rolls) instead of being
    # materialized in HBM.
    xp = jnp.pad(x_nchw, ((0, 0), (0, 0), (1, 1), (1, 1)))
    taps = [xp[:, :, dy:dy + H, dx:dx + W]                 # each [B, C, H, W]
            for dy in range(KH) for dx in range(KW)]
    pat = jnp.stack(taps, axis=-1)                         # [B, C, H, W, 9]
    pat = jnp.transpose(pat, (0, 2, 3, 1, 4))              # [B, H, W, C, 9]
    patches = pat.reshape(B, HW, CKK)
    patches = jnp.pad(patches, ((0, 0), (0, 0), (0, CKKp - CKK)))
    patches = patches.astype(jnp.bfloat16)                 # [B, HW, CKKp]

    # Weights flattened consistently with the (c, kh, kw) patch ordering,
    # zero-padded to lane-dense shapes; matmul operands cast to bf16.
    wconv = w_conv.reshape(feat, CKK).T                    # [CKK, F]
    wconv_p = jnp.zeros((CKKp, Fp), jnp.float32).at[:CKK, :feat].set(wconv)
    wconv_p = wconv_p.astype(jnp.bfloat16)
    bconv_p = jnp.zeros((1, Fp), jnp.float32).at[0, :feat].set(b_conv)
    wlin_p = jnp.zeros((Fp, NCp), jnp.float32).at[:feat, :num_classes].set(w_lin.T)
    wlin_p = wlin_p.astype(jnp.bfloat16)
    blin_p = jnp.zeros((1, NCp), jnp.float32).at[0, :num_classes].set(b_lin)

    kernel = functools.partial(_timm_fused_kernel, inv_hw=1.0 / HW, bt=bt)

    out_padded = pl.pallas_call(
        kernel,
        out_shape=jax.ShapeDtypeStruct((n_bt, bt, NCp), jnp.float32),
        grid_spec=pltpu.PrefetchScalarGridSpec(
            num_scalar_prefetch=0,
            grid=(n_bt, n_rt),
            in_specs=[
                pl.BlockSpec((bt, tile_rows, CKKp), lambda b, t: (b, t, 0)),
                pl.BlockSpec((CKKp, Fp), lambda b, t: (0, 0)),
                pl.BlockSpec((1, Fp), lambda b, t: (0, 0)),
                pl.BlockSpec((Fp, NCp), lambda b, t: (0, 0)),
                pl.BlockSpec((1, NCp), lambda b, t: (0, 0)),
            ],
            out_specs=pl.BlockSpec((1, bt, NCp), lambda b, t: (b, 0, 0)),
            scratch_shapes=[pltpu.VMEM((bt, Fp), jnp.float32)],
        ),
        compiler_params=pltpu.CompilerParams(
            dimension_semantics=("parallel", "arbitrary"),
            vmem_limit_bytes=32 * 1024 * 1024),
    )(patches, wconv_p, bconv_p, wlin_p, blin_p)

    return out_padded.reshape(B, NCp)[:, :num_classes]     # [B, num_classes]


def _reference_forward(x_nchw, params):
    """Pure-JAX (f32) reference for correctness checking."""
    w_conv, b_conv = params["conv_w"], params["conv_b"]
    w_lin, b_lin = params["lin_w"], params["lin_b"]
    y = jax.lax.conv_general_dilated(
        x_nchw, w_conv, window_strides=(1, 1), padding=((1, 1), (1, 1)),
        dimension_numbers=("NCHW", "OIHW", "NCHW"))
    y = y + b_conv[None, :, None, None]
    y = jnp.maximum(y, 0.0)
    feat = jnp.mean(y, axis=(2, 3))                        # [B, F]
    return feat @ w_lin.T + b_lin[None, :]


def make_params(key, c_in=4, feat=32, num_classes=10):
    """Deterministic synthetic params mirroring TimmModel.init_params()."""
    k1, k2 = jax.random.split(key, 2)
    fan_in = c_in * 3 * 3
    conv_w = jax.random.normal(k1, (feat, c_in, 3, 3), jnp.float32) * \
        (2.0 / fan_in) ** 0.5                              # kaiming fan_in
    conv_b = jnp.zeros((feat,), jnp.float32)
    lin_w = jax.random.normal(k2, (num_classes, feat), jnp.float32) * 0.001
    lin_b = jnp.zeros((num_classes,), jnp.float32)
    return {"conv_w": conv_w, "conv_b": conv_b,
            "lin_w": lin_w, "lin_b": lin_b}


if __name__ == "__main__":
    key = jax.random.PRNGKey(0)
    kx, kp = jax.random.split(key)

    B, C, H, W = 2, 4, 16, 16
    x = jax.random.normal(kx, (B, C, H, W), jnp.float32)   # NCHW input
    params = make_params(kp, c_in=C, feat=32, num_classes=10)

    fwd = jax.jit(timm_model_forward)
    out = fwd(x, params)
    out = jax.block_until_ready(out)

    ref = _reference_forward(x, params)
    assert out.shape == (B, 10), out.shape
    # bf16 MXU inputs with f32 accumulation -> loose-but-meaningful tolerance.
    assert jnp.allclose(out, ref, atol=2e-3, rtol=2e-2), \
        f"max err {jnp.max(jnp.abs(out - ref))}"

    print("KERNEL_OK")
</pallas_src>

<mosaic_0001>
module attributes {stable_mosaic.version = 11 : i64} {
  func.func @_timm_fused_kernel(%arg0: i32, %arg1: i32, %arg2: memref<2x256x128xbf16, #tpu.memory_space<vmem>>, %arg3: memref<128x128xbf16, #tpu.memory_space<vmem>>, %arg4: memref<1x128xf32, #tpu.memory_space<vmem>>, %arg5: memref<128x128xbf16, #tpu.memory_space<vmem>>, %arg6: memref<1x128xf32, #tpu.memory_space<vmem>>, %arg7: memref<1x2x128xf32, #tpu.memory_space<vmem>>, %arg8: memref<2x128xf32, #tpu.memory_space<vmem>>) attributes {dimension_semantics = [#tpu.dimension_semantics<parallel>, #tpu.dimension_semantics<arbitrary>], iteration_bounds = array<i64: 1, 1>, scalar_prefetch = 0 : i64, scratch_operands = 1 : i64, tpu.core_type = #tpu.core_type<tc>, window_params = [{transform_indices = @transform_0, window_bounds = array<i64: 2, 256, 128>}, {pipeline_mode = #tpu.pipeline_mode<synchronous>, transform_indices = @transform_1, window_bounds = array<i64: 128, 128>}, {pipeline_mode = #tpu.pipeline_mode<synchronous>, transform_indices = @transform_2, window_bounds = array<i64: 1, 128>}, {pipeline_mode = #tpu.pipeline_mode<synchronous>, transform_indices = @transform_3, window_bounds = array<i64: 128, 128>}, {pipeline_mode = #tpu.pipeline_mode<synchronous>, transform_indices = @transform_4, window_bounds = array<i64: 1, 128>}, {transform_indices = @transform_5, window_bounds = array<i64: 1, 2, 128>}]} {
    %c0_i32 = arith.constant 0 : i32
    %0 = arith.cmpi eq, %arg1, %c0_i32 : i32
    %1 = arith.extui %0 : i1 to i32
    %c0_i32_0 = arith.constant 0 : i32
    %2 = arith.cmpi ne, %1, %c0_i32_0 : i32
    scf.if %2 {
      %cst_24 = arith.constant 0.000000e+00 : f32
      %32 = vector.broadcast %cst_24 : f32 to vector<2x128xf32>
      %c0_25 = arith.constant 0 : index
      %c0_26 = arith.constant 0 : index
      %33 = vector.load %arg8[%c0_25, %c0_26] : memref<2x128xf32, #tpu.memory_space<vmem>>, vector<2x128xf32>
      tpu.vector_store %arg8[%c0_25, %c0_26], %32 {strides = array<i32>} : memref<2x128xf32, #tpu.memory_space<vmem>>, vector<2x128xf32>,
    } else {
    }
    %c0 = arith.constant 0 : index
    %c0_1 = arith.constant 0 : index
    %c0_2 = arith.constant 0 : index
    %3 = vector.load %arg2[%c0, %c0_1, %c0_2] : memref<2x256x128xbf16, #tpu.memory_space<vmem>>, vector<1x256x128xbf16>
    %4 = vector.shape_cast %3 : vector<1x256x128xbf16> to vector<256x128xbf16>
    %c0_3 = arith.constant 0 : index
    %c0_4 = arith.constant 0 : index
    %5 = vector.load %arg3[%c0_3, %c0_4] : memref<128x128xbf16, #tpu.memory_space<vmem>>, vector<128x128xbf16>
    %cst = arith.constant dense<0.000000e+00> : vector<256x128xf32>
    %6 = tpu.matmul %4, %5, %cst {dimension_numbers = #tpu.dot_dimension_numbers<[1], [0], [0], [1], [0, 0, 1, 1], [], []>} : vector<256x128xbf16>, vector<128x128xbf16>, vector<256x128xf32> -> vector<256x128xf32>
    %c0_5 = arith.constant 0 : index
    %c0_6 = arith.constant 0 : index
    %7 = vector.load %arg4[%c0_5, %c0_6] : memref<1x128xf32, #tpu.memory_space<vmem>>, vector<1x128xf32>
    %8 = vector.broadcast %7 : vector<1x128xf32> to vector<256x128xf32>
    %9 = arith.addf %6, %8 : vector<256x128xf32>
    %cst_7 = arith.constant 0.000000e+00 : f32
    %10 = vector.broadcast %cst_7 : f32 to vector<256x128xf32>
    %11 = arith.maximumf %9, %10 : vector<256x128xf32>
    %cst_8 = arith.constant dense<0.000000e+00> : vector<128xf32>
    %12 = vector.multi_reduction <add>, %11, %cst_8 [0] : vector<256x128xf32> to vector<128xf32>
    %13 = vector.shape_cast %12 : vector<128xf32> to vector<1x128xf32>
    %c1 = arith.constant 1 : index
    %c0_9 = arith.constant 0 : index
    %c0_10 = arith.constant 0 : index
    %14 = vector.load %arg2[%c1, %c0_9, %c0_10] : memref<2x256x128xbf16, #tpu.memory_space<vmem>>, vector<1x256x128xbf16>
    %15 = vector.shape_cast %14 : vector<1x256x128xbf16> to vector<256x128xbf16>
    %c0_11 = arith.constant 0 : index
    %c0_12 = arith.constant 0 : index
    %16 = vector.load %arg3[%c0_11, %c0_12] : memref<128x128xbf16, #tpu.memory_space<vmem>>, vector<128x128xbf16>
    %cst_13 = arith.constant dense<0.000000e+00> : vector<256x128xf32>
    %17 = tpu.matmul %15, %16, %cst_13 {dimension_numbers = #tpu.dot_dimension_numbers<[1], [0], [0], [1], [0, 0, 1, 1], [], []>} : vector<256x128xbf16>, vector<128x128xbf16>, vector<256x128xf32> -> vector<256x128xf32>
    %c0_14 = arith.constant 0 : index
    %c0_15 = arith.constant 0 : index
    %18 = vector.load %arg4[%c0_14, %c0_15] : memref<1x128xf32, #tpu.memory_space<vmem>>, vector<1x128xf32>
    %19 = vector.broadcast %18 : vector<1x128xf32> to vector<256x128xf32>
    %20 = arith.addf %17, %19 : vector<256x128xf32>
    %cst_16 = arith.constant 0.000000e+00 : f32
    %21 = vector.broadcast %cst_16 : f32 to vector<256x128xf32>
    %22 = arith.maximumf %20, %21 : vector<256x128xf32>
    %cst_17 = arith.constant dense<0.000000e+00> : vector<128xf32>
    %23 = vector.multi_reduction <add>, %22, %cst_17 [0] : vector<256x128xf32> to vector<128xf32>
    %24 = vector.shape_cast %23 : vector<128xf32> to vector<1x128xf32>
    %25 = tpu.concatenate %13, %24 in 0 : vector<1x128xf32>, vector<1x128xf32> -> vector<2x128xf32>
    %c0_18 = arith.constant 0 : index
    %c0_19 = arith.constant 0 : index
    %26 = vector.load %arg8[%c0_18, %c0_19] : memref<2x128xf32, #tpu.memory_space<vmem>>, vector<2x128xf32>
    %27 = arith.addf %26, %25 : vector<2x128xf32>
    %c0_20 = arith.constant 0 : index
    %c0_21 = arith.constant 0 : index
    %28 = vector.load %arg8[%c0_20, %c0_21] : memref<2x128xf32, #tpu.memory_space<vmem>>, vector<2x128xf32>
    tpu.vector_store %arg8[%c0_20, %c0_21], %27 {strides = array<i32>} : memref<2x128xf32, #tpu.memory_space<vmem>>, vector<2x128xf32>,
    %c0_i32_22 = arith.constant 0 : i32
    %29 = arith.cmpi eq, %arg1, %c0_i32_22 : i32
    %30 = arith.extui %29 : i1 to i32
    %c0_i32_23 = arith.constant 0 : i32
    %31 = arith.cmpi ne, %30, %c0_i32_23 : i32
    scf.if %31 {
      %c0_24 = arith.constant 0 : index
      %c0_25 = arith.constant 0 : index
      %32 = vector.load %arg8[%c0_24, %c0_25] : memref<2x128xf32, #tpu.memory_space<vmem>>, vector<2x128xf32>
      %cst_26 = arith.constant 3.906250e-03 : f32
      %33 = vector.broadcast %cst_26 : f32 to vector<2x128xf32>
      %34 = arith.mulf %32, %33 : vector<2x128xf32>
      %35 = arith.truncf %34 : vector<2x128xf32> to vector<2x128xbf16>
      %c0_27 = arith.constant 0 : index
      %c0_28 = arith.constant 0 : index
      %36 = vector.load %arg5[%c0_27, %c0_28] : memref<128x128xbf16, #tpu.memory_space<vmem>>, vector<128x128xbf16>
      %cst_29 = arith.constant dense<0.000000e+00> : vector<2x128xf32>
      %37 = tpu.matmul %35, %36, %cst_29 {dimension_numbers = #tpu.dot_dimension_numbers<[1], [0], [0], [1], [0, 0, 1, 1], [], []>} : vector<2x128xbf16>, vector<128x128xbf16>, vector<2x128xf32> -> vector<2x128xf32>
      %c0_30 = arith.constant 0 : index
      %c0_31 = arith.constant 0 : index
      %38 = vector.load %arg6[%c0_30, %c0_31] : memref<1x128xf32, #tpu.memory_space<vmem>>, vector<1x128xf32>
      %39 = vector.broadcast %38 : vector<1x128xf32> to vector<2x128xf32>
      %40 = arith.addf %37, %39 : vector<2x128xf32>
      %41 = vector.shape_cast %40 : vector<2x128xf32> to vector<1x2x128xf32>
      %c0_32 = arith.constant 0 : index
      %c0_33 = arith.constant 0 : index
      %c0_34 = arith.constant 0 : index
      %42 = vector.load %arg7[%c0_32, %c0_33, %c0_34] : memref<1x2x128xf32, #tpu.memory_space<vmem>>, vector<1x2x128xf32>
      tpu.vector_store %arg7[%c0_32, %c0_33, %c0_34], %41 {strides = array<i32>} : memref<1x2x128xf32, #tpu.memory_space<vmem>>, vector<1x2x128xf32>,
    } else {
    }
    return
  }
  func.func @transform_0(%arg0: i32, %arg1: i32) -> (i32, i32, i32) {
    %c0_i32 = arith.constant 0 : i32
    %c0_i32_0 = arith.constant 0 : i32
    return %arg0, %arg1, %c0_i32 : i32, i32, i32
  }
  func.func @transform_1(%arg0: i32, %arg1: i32) -> (i32, i32) {
    %c0_i32 = arith.constant 0 : i32
    %c0_i32_0 = arith.constant 0 : i32
    %c0_i32_1 = arith.constant 0 : i32
    return %c0_i32, %c0_i32_0 : i32, i32
  }
  func.func @transform_2(%arg0: i32, %arg1: i32) -> (i32, i32) {
    %c0_i32 = arith.constant 0 : i32
    %c0_i32_0 = arith.constant 0 : i32
    %c0_i32_1 = arith.constant 0 : i32
    return %c0_i32, %c0_i32_0 : i32, i32
  }
  func.func @transform_3(%arg0: i32, %arg1: i32) -> (i32, i32) {
    %c0_i32 = arith.constant 0 : i32
    %c0_i32_0 = arith.constant 0 : i32
    %c0_i32_1 = arith.constant 0 : i32
    return %c0_i32, %c0_i32_0 : i32, i32
  }
  func.func @transform_4(%arg0: i32, %arg1: i32) -> (i32, i32) {
    %c0_i32 = arith.constant 0 : i32
    %c0_i32_0 = arith.constant 0 : i32
    %c0_i32_1 = arith.constant 0 : i32
    return %c0_i32, %c0_i32_0 : i32, i32
  }
  func.func @transform_5(%arg0: i32, %arg1: i32) -> (i32, i32, i32) {
    %c0_i32 = arith.constant 0 : i32
    %c0_i32_0 = arith.constant 0 : i32
    %c0_i32_1 = arith.constant 0 : i32
    return %arg0, %c0_i32, %c0_i32_0 : i32, i32, i32
  }
}

</mosaic_0001>

<llo_original>
// kernel: timm_model_forward.1
$region0: #{timm_model_forward.1}
  #allocation0 [shape = 'u32[]', space=smem, size = 0x4, offset = 0x4, fixed_abs, tag = 'smem constant byte address 0x4 - core index']
  #allocation1 [shape = 'u32[72,128]{1,0:T(1,128)}', space=vmem, size = 0x9000, scoped, tag = 'internal scratch']
  #allocation2 [shape = 'f32[2,128]{1,0:T(2,128)}', space=vmem, size = 0x400, scoped, tag = 'scratch operand']
  %s0 = inlined_call_operand.vmem [shape: bf16[2,256,128], index: 0, kind: input, shape index: {}]
  %s1 = inlined_call_operand.vmem [shape: bf16[128,128], index: 1, kind: input, shape index: {}]
  %s2 = inlined_call_operand.vmem [shape: f32[1,128], index: 2, kind: input, shape index: {}]
  %s3 = inlined_call_operand.vmem [shape: bf16[128,128], index: 3, kind: input, shape index: {}]
  %s4 = inlined_call_operand.vmem [shape: f32[1,128], index: 4, kind: input, shape index: {}]
  %s5 = inlined_call_operand.hbm [shape: f32[1,2,128], index: 5, kind: output, shape index: {}]
  %s6 = sld [smem:[#allocation0]]
  $region38: #{timm_model_forward.1} parent=0
    _
  %s8 = ssub.s32 1, %s6
  %s9 = scalar_select 0, %s8, %s6
  $region1: #{timm_model_forward.1} parent=0
    #allocation3 [shape = 'u8[1024]{0}', space=vmem, size = 0x400, scoped, tag = 'output window, operand 0, single buffered']
    #allocation4 [shape = 's32[1]{0}', space=sflag, size = 0x4, scoped, tag = 'scoped memory for timm_model_forward.1']
    %10 = vsyncpa [#allocation4], 0
    // Predicated region
    $region2: #{timm_model_forward.1} parent=1 // pred_check
      _
    $region3: #{timm_model_forward.1} parent=1 // pred_check_branch
      %12 = sbr.rel (0) target = $region5
    $region4: #{timm_model_forward.1} parent=1 // pred_region
      _
    $region5: #{timm_model_forward.1} parent=1 // pred_fallthru
      _
    // Predicated region
    $region6: #{timm_model_forward.1} parent=1 // pred_check
      _
    $region7: #{timm_model_forward.1} parent=1 // pred_check_branch
      %14 = sbr.rel (0) target = $region9
    $region8: #{timm_model_forward.1} parent=1 // pred_region
      _
    $region9: #{timm_model_forward.1} parent=1 // pred_fallthru
      _
    // Predicated region
    $region10: #{timm_model_forward.1} parent=1 // pred_check
      _
    $region11: #{timm_model_forward.1} parent=1 // pred_check_branch
      %16 = sbr.rel (0) target = $region13
    $region12: #{timm_model_forward.1} parent=1 // pred_region
      _
    $region13: #{timm_model_forward.1} parent=1 // pred_fallthru
      _
    // Predicated region
    $region14: #{timm_model_forward.1} parent=1 // pred_check
      _
    $region15: #{timm_model_forward.1} parent=1 // pred_check_branch
      %18 = sbr.rel (0) target = $region17
    $region16: #{timm_model_forward.1} parent=1 // pred_region
      _
    $region17: #{timm_model_forward.1} parent=1 // pred_fallthru
      _
    // Predicated region
    $region18: #{timm_model_forward.1} parent=1 // pred_check
      _
    $region19: #{timm_model_forward.1} parent=1 // pred_check_branch
      %20 = sbr.rel (0) target = $region21
    $region20: #{timm_model_forward.1} parent=1 // pred_region
      _
    $region21: #{timm_model_forward.1} parent=1 // pred_fallthru
      _
    %p21 = scmp.eq.s32.totalorder 0, 0
    // Predicated region
    $region22: #{timm_model_forward.1} parent=1 // pred_check
      %p22 = pneg %p21
    $region23: #{timm_model_forward.1} parent=1 // pred_check_branch
      %24 = sbr.rel (%p22) target = $region25
    $region24: #{timm_model_forward.1} parent=1 // pred_region
      %25 = vst [vmem:[#allocation2] sm:$0x3] 0.0
    $region25: #{timm_model_forward.1} parent=1 // pred_fallthru
      _
    %v26 = vld [vmem:[%s0] sm:$0xf]
    %v27 = vld [vmem:[%s0 + $0x4] sm:$0xf]
    %v28 = vld [vmem:[%s0 + $0x8] sm:$0xf]
    %v29 = vld [vmem:[%s0 + $0xc] sm:$0xf]
    %v30 = vld [vmem:[%s0 + $0x10] sm:$0xf]
    %v31 = vld [vmem:[%s0 + $0x14] sm:$0xf]
    %v32 = vld [vmem:[%s0 + $0x18] sm:$0xf]
    %v33 = vld [vmem:[%s0 + $0x1c] sm:$0xf]
    %v34 = vld [vmem:[%s0 + $0x20] sm:$0xf]
    %v35 = vld [vmem:[%s0 + $0x24] sm:$0xf]
    %v36 = vld [vmem:[%s0 + $0x28] sm:$0xf]
    %v37 = vld [vmem:[%s0 + $0x2c] sm:$0xf]
    %v38 = vld [vmem:[%s0 + $0x30] sm:$0xf]
    %v39 = vld [vmem:[%s0 + $0x34] sm:$0xf]
    %v40 = vld [vmem:[%s0 + $0x38] sm:$0xf]
    %v41 = vld [vmem:[%s0 + $0x3c] sm:$0xf]
    %v42 = vld [vmem:[%s0 + $0x40] sm:$0xf]
    %v43 = vld [vmem:[%s0 + $0x44] sm:$0xf]
    %v44 = vld [vmem:[%s0 + $0x48] sm:$0xf]
    %v45 = vld [vmem:[%s0 + $0x4c] sm:$0xf]
    %v46 = vld [vmem:[%s0 + $0x50] sm:$0xf]
    %v47 = vld [vmem:[%s0 + $0x54] sm:$0xf]
    %v48 = vld [vmem:[%s0 + $0x58] sm:$0xf]
    %v49 = vld [vmem:[%s0 + $0x5c] sm:$0xf]
    %v50 = vld [vmem:[%s0 + $0x60] sm:$0xf]
    %v51 = vld [vmem:[%s0 + $0x64] sm:$0xf]
    %v52 = vld [vmem:[%s0 + $0x68] sm:$0xf]
    %v53 = vld [vmem:[%s0 + $0x6c] sm:$0xf]
    %v54 = vld [vmem:[%s0 + $0x70] sm:$0xf]
    %v55 = vld [vmem:[%s0 + $0x74] sm:$0xf]
    %v56 = vld [vmem:[%s0 + $0x78] sm:$0xf]
    %v57 = vld [vmem:[%s0 + $0x7c] sm:$0xf]
    %v58 = vld [vmem:[%s1] sm:$0xf]
    %v59 = vld [vmem:[%s1 + $0x4] sm:$0xf]
    %v60 = vld [vmem:[%s1 + $0x8] sm:$0xf]
    %v61 = vld [vmem:[%s1 + $0xc] sm:$0xf]
    %v62 = vld [vmem:[%s1 + $0x10] sm:$0xf]
    %v63 = vld [vmem:[%s1 + $0x14] sm:$0xf]
    %v64 = vld [vmem:[%s1 + $0x18] sm:$0xf]
    %v65 = vld [vmem:[%s1 + $0x1c] sm:$0xf]
    %v66 = vld [vmem:[%s1 + $0x20] sm:$0xf]
    %v67 = vld [vmem:[%s1 + $0x24] sm:$0xf]
    %v68 = vld [vmem:[%s1 + $0x28] sm:$0xf]
    %v69 = vld [vmem:[%s1 + $0x2c] sm:$0xf]
    %v70 = vld [vmem:[%s1 + $0x30] sm:$0xf]
    %v71 = vld [vmem:[%s1 + $0x34] sm:$0xf]
    %v72 = vld [vmem:[%s1 + $0x38] sm:$0xf]
    %v73 = vld [vmem:[%s1 + $0x3c] sm:$0xf]
    %v74 = vld [vmem:[%s2] sm:$0x1]
    %v76 = vperm.slane %v74, 0
    %v110 = vunpack.c.l.b16 %v26
    %v111 = vunpack.c.l.b16 %v27
    %v112 = vunpack.c.l.b16 %v28
    %v113 = vunpack.c.l.b16 %v29
    %v114 = vunpack.c.l.b16 %v30
    %v115 = vunpack.c.l.b16 %v31
    %v116 = vunpack.c.l.b16 %v32
    %v117 = vunpack.c.l.b16 %v33
    %v118 = vunpack.c.l.b16 %v34
    %v119 = vunpack.c.l.b16 %v35
    %v120 = vunpack.c.l.b16 %v36
    %v121 = vunpack.c.l.b16 %v37
    %v122 = vunpack.c.l.b16 %v38
    %v123 = vunpack.c.l.b16 %v39
    %v124 = vunpack.c.l.b16 %v40
    %v125 = vunpack.c.l.b16 %v41
    %v126 = vunpack.c.l.b16 %v42
    %v127 = vunpack.c.l.b16 %v43
    %v128 = vunpack.c.l.b16 %v44
    %v129 = vunpack.c.l.b16 %v45
    %v130 = vunpack.c.l.b16 %v46
    %v131 = vunpack.c.l.b16 %v47
    %v132 = vunpack.c.l.b16 %v48
    %v133 = vunpack.c.l.b16 %v49
    %v134 = vunpack.c.l.b16 %v50
    %v135 = vunpack.c.l.b16 %v51
    %v136 = vunpack.c.l.b16 %v52
    %v137 = vunpack.c.l.b16 %v53
    %v138 = vunpack.c.l.b16 %v54
    %v139 = vunpack.c.l.b16 %v55
    %v140 = vunpack.c.l.b16 %v56
    %v141 = vunpack.c.l.b16 %v57
    %v142 = vpack.c.b16 %v111, %v110
    %v143 = vpack.c.b16 %v113, %v112
    %v144 = vpack.c.b16 %v115, %v114
    %v145 = vpack.c.b16 %v117, %v116
    %v146 = vpack.c.b16 %v119, %v118
    %v147 = vpack.c.b16 %v121, %v120
    %v148 = vpack.c.b16 %v123, %v122
    %v149 = vpack.c.b16 %v125, %v124
    %v150 = vpack.c.b16 %v127, %v126
    %v151 = vpack.c.b16 %v129, %v128
    %v152 = vpack.c.b16 %v131, %v130
    %v153 = vpack.c.b16 %v133, %v132
    %v154 = vpack.c.b16 %v135, %v134
    %v155 = vpack.c.b16 %v137, %v136
    %v156 = vpack.c.b16 %v139, %v138
    %v157 = vpack.c.b16 %v141, %v140
    %v190 = vunpack.c.l.b16 %v58
    %v191 = vunpack.c.l.b16 %v59
    %v192 = vunpack.c.l.b16 %v60
    %v193 = vunpack.c.l.b16 %v61
    %v194 = vunpack.c.l.b16 %v62
    %v195 = vunpack.c.l.b16 %v63
    %v196 = vunpack.c.l.b16 %v64
    %v197 = vunpack.c.l.b16 %v65
    %v198 = vunpack.c.l.b16 %v66
    %v199 = vunpack.c.l.b16 %v67
    %v200 = vunpack.c.l.b16 %v68
    %v201 = vunpack.c.l.b16 %v69
    %v202 = vunpack.c.l.b16 %v70
    %v203 = vunpack.c.l.b16 %v71
    %v204 = vunpack.c.l.b16 %v72
    %v205 = vunpack.c.l.b16 %v73
    %v206 = vpack.c.b16 %v191, %v190
    %v207 = vpack.c.b16 %v193, %v192
    %v208 = vpack.c.b16 %v195, %v194
    %v209 = vpack.c.b16 %v197, %v196
    %v210 = vpack.c.b16 %v199, %v198
    %v211 = vpack.c.b16 %v201, %v200
    %v212 = vpack.c.b16 %v203, %v202
    %v213 = vpack.c.b16 %v205, %v204
    %222 = vmatpush.bf16.msra.mxu0 %v213
    %223 = vmatpush.bf16.msra.mxu0 %v212
    %224 = vmatpush.bf16.msra.mxu0 %v211
    %225 = vmatpush.bf16.msra.mxu0 %v210
    %226 = vmatpush.bf16.msra.mxu0 %v209
    %227 = vmatpush.bf16.msra.mxu0 %v208
    %228 = vmatpush.bf16.msra.mxu0 %v207
    %229 = vmatpush.bf16.msra.mxu0 %v206
    %230 = vmatmul.bf16.gmra.mxu0 %v142
    %v231 = vpop.f32.mrf.mxu0
    %v232 = vadd.f32 %v76, %v231
    %v233 = vpop.f32.mrf.mxu0
    %v234 = vadd.f32 %v76, %v233
    %235 = vmatmul.bf16.gmra.mxu0 %v143
    %v236 = vpop.f32.mrf.mxu0
    %v237 = vadd.f32 %v76, %v236
    %v238 = vpop.f32.mrf.mxu0
    %v239 = vadd.f32 %v76, %v238
    %240 = vmatmul.bf16.gmra.mxu0 %v144
    %v241 = vpop.f32.mrf.mxu0
    %v242 = vadd.f32 %v76, %v241
    %v243 = vpop.f32.mrf.mxu0
    %v244 = vadd.f32 %v76, %v243
    %245 = vmatmul.bf16.gmra.mxu0 %v145
    %v246 = vpop.f32.mrf.mxu0
    %v247 = vadd.f32 %v76, %v246
    %v248 = vpop.f32.mrf.mxu0
    %v249 = vadd.f32 %v76, %v248
    %250 = vmatmul.bf16.gmra.mxu0 %v146
    %v251 = vpop.f32.mrf.mxu0
    %v252 = vadd.f32 %v76, %v251
    %v253 = vpop.f32.mrf.mxu0
    %v254 = vadd.f32 %v76, %v253
    %255 = vmatmul.bf16.gmra.mxu0 %v147
    %v256 = vpop.f32.mrf.mxu0
    %v257 = vadd.f32 %v76, %v256
    %v258 = vpop.f32.mrf.mxu0
    %v259 = vadd.f32 %v76, %v258
    %260 = vmatmul.bf16.gmra.mxu0 %v148
    %v261 = vpop.f32.mrf.mxu0
    %v262 = vadd.f32 %v76, %v261
    %v263 = vpop.f32.mrf.mxu0
    %v264 = vadd.f32 %v76, %v263
    %265 = vmatmul.bf16.gmra.mxu0 %v149
    %v266 = vpop.f32.mrf.mxu0
    %v267 = vadd.f32 %v76, %v266
    %v268 = vpop.f32.mrf.mxu0
    %v269 = vadd.f32 %v76, %v268
    %270 = vmatmul.bf16.gmra.mxu0 %v150
    %v271 = vpop.f32.mrf.mxu0
    %v272 = vadd.f32 %v76, %v271
    %v273 = vpop.f32.mrf.mxu0
    %v274 = vadd.f32 %v76, %v273
    %275 = vmatmul.bf16.gmra.mxu0 %v151
    %v276 = vpop.f32.mrf.mxu0
    %v277 = vadd.f32 %v76, %v276
    %v278 = vpop.f32.mrf.mxu0
    %v279 = vadd.f32 %v76, %v278
    %280 = vmatmul.bf16.gmra.mxu0 %v152
    %v281 = vpop.f32.mrf.mxu0
    %v282 = vadd.f32 %v76, %v281
    %v283 = vpop.f32.mrf.mxu0
    %v284 = vadd.f32 %v76, %v283
    %285 = vmatmul.bf16.gmra.mxu0 %v153
    %v286 = vpop.f32.mrf.mxu0
    %v287 = vadd.f32 %v76, %v286
    %v288 = vpop.f32.mrf.mxu0
    %v289 = vadd.f32 %v76, %v288
    %290 = vmatmul.bf16.gmra.mxu0 %v154
    %v291 = vpop.f32.mrf.mxu0
    %v292 = vadd.f32 %v76, %v291
    %v293 = vpop.f32.mrf.mxu0
    %v294 = vadd.f32 %v76, %v293
    %295 = vmatmul.bf16.gmra.mxu0 %v155
    %v296 = vpop.f32.mrf.mxu0
    %v297 = vadd.f32 %v76, %v296
    %v298 = vpop.f32.mrf.mxu0
    %v299 = vadd.f32 %v76, %v298
    %300 = vmatmul.bf16.gmra.mxu0 %v156
    %v301 = vpop.f32.mrf.mxu0
    %v302 = vadd.f32 %v76, %v301
    %v303 = vpop.f32.mrf.mxu0
    %v304 = vadd.f32 %v76, %v303
    %305 = vmatmul.bf16.gmra.mxu0 %v157
    %v306 = vpop.f32.mrf.mxu0
    %v307 = vadd.f32 %v76, %v306
    %v308 = vpop.f32.mrf.mxu0
    %v309 = vadd.f32 %v76, %v308
    %310 = vdwg.mxu0
    %v311 = vmax.f32 %v232, 0.0
    %v312 = vmax.f32 %v234, 0.0
    %v313 = vmax.f32 %v237, 0.0
    %v314 = vmax.f32 %v239, 0.0
    %v315 = vmax.f32 %v242, 0.0
    %v316 = vmax.f32 %v244, 0.0
    %v317 = vmax.f32 %v247, 0.0
    %v318 = vmax.f32 %v249, 0.0
    %v319 = vmax.f32 %v252, 0.0
    %v320 = vmax.f32 %v254, 0.0
    %v321 = vmax.f32 %v257, 0.0
    %v322 = vmax.f32 %v259, 0.0
    %v323 = vmax.f32 %v262, 0.0
    %v324 = vmax.f32 %v264, 0.0
    %v325 = vmax.f32 %v267, 0.0
    %v326 = vmax.f32 %v269, 0.0
    %v327 = vmax.f32 %v272, 0.0
    %v328 = vmax.f32 %v274, 0.0
    %v329 = vmax.f32 %v277, 0.0
    %v330 = vmax.f32 %v279, 0.0
    %v331 = vmax.f32 %v282, 0.0
    %v332 = vmax.f32 %v284, 0.0
    %v333 = vmax.f32 %v287, 0.0
    %v334 = vmax.f32 %v289, 0.0
    %v335 = vmax.f32 %v292, 0.0
    %v336 = vmax.f32 %v294, 0.0
    %v337 = vmax.f32 %v297, 0.0
    %v338 = vmax.f32 %v299, 0.0
    %v339 = vmax.f32 %v302, 0.0
    %v340 = vmax.f32 %v304, 0.0
    %v341 = vmax.f32 %v307, 0.0
    %v342 = vmax.f32 %v309, 0.0
    %v343 = vadd.f32 %v311, %v312
    %v344 = vadd.f32 %v343, %v313
    %v345 = vadd.f32 %v344, %v314
    %v346 = vadd.f32 %v345, %v315
    %v347 = vadd.f32 %v346, %v316
    %v348 = vadd.f32 %v347, %v317
    %v349 = vadd.f32 %v348, %v318
    %v350 = vadd.f32 %v349, %v319
    %v351 = vadd.f32 %v350, %v320
    %v352 = vadd.f32 %v351, %v321
    %v353 = vadd.f32 %v352, %v322
    %v354 = vadd.f32 %v353, %v323
    %v355 = vadd.f32 %v354, %v324
    %v356 = vadd.f32 %v355, %v325
    %v357 = vadd.f32 %v356, %v326
    %v358 = vadd.f32 %v357, %v327
    %v359 = vadd.f32 %v358, %v328
    %v360 = vadd.f32 %v359, %v329
    %v361 = vadd.f32 %v360, %v330
    %v362 = vadd.f32 %v361, %v331
    %v363 = vadd.f32 %v362, %v332
    %v364 = vadd.f32 %v363, %v333
    %v365 = vadd.f32 %v364, %v334
    %v366 = vadd.f32 %v365, %v335
    %v367 = vadd.f32 %v366, %v336
    %v368 = vadd.f32 %v367, %v337
    %v369 = vadd.f32 %v368, %v338
    %v370 = vadd.f32 %v369, %v339
    %v371 = vadd.f32 %v370, %v340
    %v372 = vadd.f32 %v371, %v341
    %v373 = vadd.f32 %v372, %v342
    %v374 = vrot.slane %v373, 4
    %v375 = vadd.f32 %v373, %v374
    %v376 = vrot.slane %v375, 2
    %v377 = vadd.f32 %v375, %v376
    %v378 = vrot.slane %v377, 1
    %v379 = vadd.f32 %v377, %v378
    %s380 = scalar_lea.vmem %s0, 128
    %v381 = vld [vmem:[%s380] sm:$0xf]
    %v382 = vld [vmem:[%s380 + $0x4] sm:$0xf]
    %v383 = vld [vmem:[%s380 + $0x8] sm:$0xf]
    %v384 = vld [vmem:[%s380 + $0xc] sm:$0xf]
    %v385 = vld [vmem:[%s380 + $0x10] sm:$0xf]
    %v386 = vld [vmem:[%s380 + $0x14] sm:$0xf]
    %v387 = vld [vmem:[%s380 + $0x18] sm:$0xf]
    %v388 = vld [vmem:[%s380 + $0x1c] sm:$0xf]
    %v389 = vld [vmem:[%s380 + $0x20] sm:$0xf]
    %v390 = vld [vmem:[%s380 + $0x24] sm:$0xf]
    %v391 = vld [vmem:[%s380 + $0x28] sm:$0xf]
    %v392 = vld [vmem:[%s380 + $0x2c] sm:$0xf]
    %v393 = vld [vmem:[%s380 + $0x30] sm:$0xf]
    %v394 = vld [vmem:[%s380 + $0x34] sm:$0xf]
    %v395 = vld [vmem:[%s380 + $0x38] sm:$0xf]
    %v396 = vld [vmem:[%s380 + $0x3c] sm:$0xf]
    %v397 = vld [vmem:[%s380 + $0x40] sm:$0xf]
    %v398 = vld [vmem:[%s380 + $0x44] sm:$0xf]
    %v399 = vld [vmem:[%s380 + $0x48] sm:$0xf]
    %v400 = vld [vmem:[%s380 + $0x4c] sm:$0xf]
    %v401 = vld [vmem:[%s380 + $0x50] sm:$0xf]
    %v402 = vld [vmem:[%s380 + $0x54] sm:$0xf]
    %v403 = vld [vmem:[%s380 + $0x58] sm:$0xf]
    %v404 = vld [vmem:[%s380 + $0x5c] sm:$0xf]
    %v405 = vld [vmem:[%s380 + $0x60] sm:$0xf]
    %v406 = vld [vmem:[%s380 + $0x64] sm:$0xf]
    %v407 = vld [vmem:[%s380 + $0x68] sm:$0xf]
    %v408 = vld [vmem:[%s380 + $0x6c] sm:$0xf]
    %v409 = vld [vmem:[%s380 + $0x70] sm:$0xf]
    %v410 = vld [vmem:[%s380 + $0x74] sm:$0xf]
    %v411 = vld [vmem:[%s380 + $0x78] sm:$0xf]
    %v412 = vld [vmem:[%s380 + $0x7c] sm:$0xf]
    %v445 = vunpack.c.l.b16 %v381
    %v446 = vunpack.c.l.b16 %v382
    %v447 = vunpack.c.l.b16 %v383
    %v448 = vunpack.c.l.b16 %v384
    %v449 = vunpack.c.l.b16 %v385
    %v450 = vunpack.c.l.b16 %v386
    %v451 = vunpack.c.l.b16 %v387
    %v452 = vunpack.c.l.b16 %v388
    %v453 = vunpack.c.l.b16 %v389
    %v454 = vunpack.c.l.b16 %v390
    %v455 = vunpack.c.l.b16 %v391
    %v456 = vunpack.c.l.b16 %v392
    %v457 = vunpack.c.l.b16 %v393
    %v458 = vunpack.c.l.b16 %v394
    %v459 = vunpack.c.l.b16 %v395
    %v460 = vunpack.c.l.b16 %v396
    %v461 = vunpack.c.l.b16 %v397
    %v462 = vunpack.c.l.b16 %v398
    %v463 = vunpack.c.l.b16 %v399
    %v464 = vunpack.c.l.b16 %v400
    %v465 = vunpack.c.l.b16 %v401
    %v466 = vunpack.c.l.b16 %v402
    %v467 = vunpack.c.l.b16 %v403
    %v468 = vunpack.c.l.b16 %v404
    %v469 = vunpack.c.l.b16 %v405
    %v470 = vunpack.c.l.b16 %v406
    %v471 = vunpack.c.l.b16 %v407
    %v472 = vunpack.c.l.b16 %v408
    %v473 = vunpack.c.l.b16 %v409
    %v474 = vunpack.c.l.b16 %v410
    %v475 = vunpack.c.l.b16 %v411
    %v476 = vunpack.c.l.b16 %v412
    %v477 = vpack.c.b16 %v446, %v445
    %v478 = vpack.c.b16 %v448, %v447
    %v479 = vpack.c.b16 %v450, %v449
    %v480 = vpack.c.b16 %v452, %v451
    %v481 = vpack.c.b16 %v454, %v453
    %v482 = vpack.c.b16 %v456, %v455
    %v483 = vpack.c.b16 %v458, %v457
    %v484 = vpack.c.b16 %v460, %v459
    %v485 = vpack.c.b16 %v462, %v461
    %v486 = vpack.c.b16 %v464, %v463
    %v487 = vpack.c.b16 %v466, %v465
    %v488 = vpack.c.b16 %v468, %v467
    %v489 = vpack.c.b16 %v470, %v469
    %v490 = vpack.c.b16 %v472, %v471
    %v491 = vpack.c.b16 %v474, %v473
    %v492 = vpack.c.b16 %v476, %v475
    %509 = vmatpush.bf16.msra.mxu0 %v213
    %510 = vmatpush.bf16.msra.mxu0 %v212
    %511 = vmatpush.bf16.msra.mxu0 %v211
    %512 = vmatpush.bf16.msra.mxu0 %v210
    %513 = vmatpush.bf16.msra.mxu0 %v209
    %514 = vmatpush.bf16.msra.mxu0 %v208
    %515 = vmatpush.bf16.msra.mxu0 %v207
    %516 = vmatpush.bf16.msra.mxu0 %v206
    %517 = vmatmul.bf16.gmra.mxu0 %v477
    %v518 = vpop.f32.mrf.mxu0
    %v519 = vadd.f32 %v76, %v518
    %v520 = vpop.f32.mrf.mxu0
    %v521 = vadd.f32 %v76, %v520
    %522 = vmatmul.bf16.gmra.mxu0 %v478
    %v523 = vpop.f32.mrf.mxu0
    %v524 = vadd.f32 %v76, %v523
    %v525 = vpop.f32.mrf.mxu0
    %v526 = vadd.f32 %v76, %v525
    %527 = vmatmul.bf16.gmra.mxu0 %v479
    %v528 = vpop.f32.mrf.mxu0
    %v529 = vadd.f32 %v76, %v528
    %v530 = vpop.f32.mrf.mxu0
    %v531 = vadd.f32 %v76, %v530
    %532 = vmatmul.bf16.gmra.mxu0 %v480
    %v533 = vpop.f32.mrf.mxu0
    %v534 = vadd.f32 %v76, %v533
    %v535 = vpop.f32.mrf.mxu0
    %v536 = vadd.f32 %v76, %v535
    %537 = vmatmul.bf16.gmra.mxu0 %v481
    %v538 = vpop.f32.mrf.mxu0
    %v539 = vadd.f32 %v76, %v538
    %v540 = vpop.f32.mrf.mxu0
    %v541 = vadd.f32 %v76, %v540
    %542 = vmatmul.bf16.gmra.mxu0 %v482
    %v543 = vpop.f32.mrf.mxu0
    %v544 = vadd.f32 %v76, %v543
    %v545 = vpop.f32.mrf.mxu0
    %v546 = vadd.f32 %v76, %v545
    %547 = vmatmul.bf16.gmra.mxu0 %v483
    %v548 = vpop.f32.mrf.mxu0
    %v549 = vadd.f32 %v76, %v548
    %v550 = vpop.f32.mrf.mxu0
    %v551 = vadd.f32 %v76, %v550
    %552 = vmatmul.bf16.gmra.mxu0 %v484
    %v553 = vpop.f32.mrf.mxu0
    %v554 = vadd.f32 %v76, %v553
    %v555 = vpop.f32.mrf.mxu0
    %v556 = vadd.f32 %v76, %v555
    %557 = vmatmul.bf16.gmra.mxu0 %v485
    %v558 = vpop.f32.mrf.mxu0
    %v559 = vadd.f32 %v76, %v558
    %v560 = vpop.f32.mrf.mxu0
    %v561 = vadd.f32 %v76, %v560
    %562 = vmatmul.bf16.gmra.mxu0 %v486
    %v563 = vpop.f32.mrf.mxu0
    %v564 = vadd.f32 %v76, %v563
    %v565 = vpop.f32.mrf.mxu0
    %v566 = vadd.f32 %v76, %v565
    %567 = vmatmul.bf16.gmra.mxu0 %v487
    %v568 = vpop.f32.mrf.mxu0
    %v569 = vadd.f32 %v76, %v568
    %v570 = vpop.f32.mrf.mxu0
    %v571 = vadd.f32 %v76, %v570
    %572 = vmatmul.bf16.gmra.mxu0 %v488
    %v573 = vpop.f32.mrf.mxu0
    %v574 = vadd.f32 %v76, %v573
    %v575 = vpop.f32.mrf.mxu0
    %v576 = vadd.f32 %v76, %v575
    %577 = vmatmul.bf16.gmra.mxu0 %v489
    %v578 = vpop.f32.mrf.mxu0
    %v579 = vadd.f32 %v76, %v578
    %v580 = vpop.f32.mrf.mxu0
    %v581 = vadd.f32 %v76, %v580
    %582 = vmatmul.bf16.gmra.mxu0 %v490
    %v583 = vpop.f32.mrf.mxu0
    %v584 = vadd.f32 %v76, %v583
    %v585 = vpop.f32.mrf.mxu0
    %v586 = vadd.f32 %v76, %v585
    %587 = vmatmul.bf16.gmra.mxu0 %v491
    %v588 = vpop.f32.mrf.mxu0
    %v589 = vadd.f32 %v76, %v588
    %v590 = vpop.f32.mrf.mxu0
    %v591 = vadd.f32 %v76, %v590
    %592 = vmatmul.bf16.gmra.mxu0 %v492
    %v593 = vpop.f32.mrf.mxu0
    %v594 = vadd.f32 %v76, %v593
    %v595 = vpop.f32.mrf.mxu0
    %v596 = vadd.f32 %v76, %v595
    %597 = vdwg.mxu0
    %v598 = vmax.f32 %v519, 0.0
    %v599 = vmax.f32 %v521, 0.0
    %v600 = vmax.f32 %v524, 0.0
    %v601 = vmax.f32 %v526, 0.0
    %v602 = vmax.f32 %v529, 0.0
    %v603 = vmax.f32 %v531, 0.0
    %v604 = vmax.f32 %v534, 0.0
    %v605 = vmax.f32 %v536, 0.0
    %v606 = vmax.f32 %v539, 0.0
    %v607 = vmax.f32 %v541, 0.0
    %v608 = vmax.f32 %v544, 0.0
    %v609 = vmax.f32 %v546, 0.0
    %v610 = vmax.f32 %v549, 0.0
    %v611 = vmax.f32 %v551, 0.0
    %v612 = vmax.f32 %v554, 0.0
    %v613 = vmax.f32 %v556, 0.0
    %v614 = vmax.f32 %v559, 0.0
    %v615 = vmax.f32 %v561, 0.0
    %v616 = vmax.f32 %v564, 0.0
    %v617 = vmax.f32 %v566, 0.0
    %v618 = vmax.f32 %v569, 0.0
    %v619 = vmax.f32 %v571, 0.0
    %v620 = vmax.f32 %v574, 0.0
    %v621 = vmax.f32 %v576, 0.0
    %v622 = vmax.f32 %v579, 0.0
    %v623 = vmax.f32 %v581, 0.0
    %v624 = vmax.f32 %v584, 0.0
    %v625 = vmax.f32 %v586, 0.0
    %v626 = vmax.f32 %v589, 0.0
    %v627 = vmax.f32 %v591, 0.0
    %v628 = vmax.f32 %v594, 0.0
    %v629 = vmax.f32 %v596, 0.0
    %v630 = vadd.f32 %v598, %v599
    %v631 = vadd.f32 %v630, %v600
    %v632 = vadd.f32 %v631, %v601
    %v633 = vadd.f32 %v632, %v602
    %v634 = vadd.f32 %v633, %v603
    %v635 = vadd.f32 %v634, %v604
    %v636 = vadd.f32 %v635, %v605
    %v637 = vadd.f32 %v636, %v606
    %v638 = vadd.f32 %v637, %v607
    %v639 = vadd.f32 %v638, %v608
    %v640 = vadd.f32 %v639, %v609
    %v641 = vadd.f32 %v640, %v610
    %v642 = vadd.f32 %v641, %v611
    %v643 = vadd.f32 %v642, %v612
    %v644 = vadd.f32 %v643, %v613
    %v645 = vadd.f32 %v644, %v614
    %v646 = vadd.f32 %v645, %v615
    %v647 = vadd.f32 %v646, %v616
    %v648 = vadd.f32 %v647, %v617
    %v649 = vadd.f32 %v648, %v618
    %v650 = vadd.f32 %v649, %v619
    %v651 = vadd.f32 %v650, %v620
    %v652 = vadd.f32 %v651, %v621
    %v653 = vadd.f32 %v652, %v622
    %v654 = vadd.f32 %v653, %v623
    %v655 = vadd.f32 %v654, %v624
    %v656 = vadd.f32 %v655, %v625
    %v657 = vadd.f32 %v656, %v626
    %v658 = vadd.f32 %v657, %v627
    %v659 = vadd.f32 %v658, %v628
    %v660 = vadd.f32 %v659, %v629
    %v661 = vrot.slane %v660, 4
    %v662 = vadd.f32 %v660, %v661
    %v663 = vrot.slane %v662, 2
    %v664 = vadd.f32 %v662, %v663
    %v665 = vrot.slane %v664, 1
    %v666 = vadd.f32 %v664, %v665
    %vm667 = vcmask 1040384
    %v668 = vsel %vm667, %v379, %v666
    %v669 = vld [vmem:[#allocation2] sm:$0x3]
    %v670 = vadd.f32 %v669, %v668
    %671 = vst [vmem:[#allocation2] sm:$0x3] %v670
    // Predicated region
    $region26: #{timm_model_forward.1} parent=1 // pred_check
      %p672 = pneg %p21
    $region27: #{timm_model_forward.1} parent=1 // pred_check_branch
      %674 = sbr.rel (%p672) target = $region29
    $region28: #{timm_model_forward.1} parent=1 // pred_region
      %v675 = vld [vmem:[#allocation2] sm:$0x3]
      %v676 = vmul.f32 %v675, 0.00390625
      %v677 = vpack.c.bf16 %v676, %v676
      %v678 = vld [vmem:[%s3] sm:$0xf]
      %v679 = vld [vmem:[%s3 + $0x4] sm:$0xf]
      %v680 = vld [vmem:[%s3 + $0x8] sm:$0xf]
      %v681 = vld [vmem:[%s3 + $0xc] sm:$0xf]
      %v682 = vld [vmem:[%s3 + $0x10] sm:$0xf]
      %v683 = vld [vmem:[%s3 + $0x14] sm:$0xf]
      %v684 = vld [vmem:[%s3 + $0x18] sm:$0xf]
      %v685 = vld [vmem:[%s3 + $0x1c] sm:$0xf]
      %v686 = vld [vmem:[%s3 + $0x20] sm:$0xf]
      %v687 = vld [vmem:[%s3 + $0x24] sm:$0xf]
      %v688 = vld [vmem:[%s3 + $0x28] sm:$0xf]
      %v689 = vld [vmem:[%s3 + $0x2c] sm:$0xf]
      %v690 = vld [vmem:[%s3 + $0x30] sm:$0xf]
      %v691 = vld [vmem:[%s3 + $0x34] sm:$0xf]
      %v692 = vld [vmem:[%s3 + $0x38] sm:$0xf]
      %v693 = vld [vmem:[%s3 + $0x3c] sm:$0xf]
      %v694 = vld [vmem:[%s4] sm:$0x1]
      %v696 = vperm.slane %v694, 0
      %v714 = vunpack.c.l.b16 %v678
      %v715 = vunpack.c.l.b16 %v679
      %v716 = vunpack.c.l.b16 %v680
      %v717 = vunpack.c.l.b16 %v681
      %v718 = vunpack.c.l.b16 %v682
      %v719 = vunpack.c.l.b16 %v683
      %v720 = vunpack.c.l.b16 %v684
      %v721 = vunpack.c.l.b16 %v685
      %v722 = vunpack.c.l.b16 %v686
      %v723 = vunpack.c.l.b16 %v687
      %v724 = vunpack.c.l.b16 %v688
      %v725 = vunpack.c.l.b16 %v689
      %v726 = vunpack.c.l.b16 %v690
      %v727 = vunpack.c.l.b16 %v691
      %v728 = vunpack.c.l.b16 %v692
      %v729 = vunpack.c.l.b16 %v693
      %v730 = vpack.c.b16 %v715, %v714
      %v731 = vpack.c.b16 %v717, %v716
      %v732 = vpack.c.b16 %v719, %v718
      %v733 = vpack.c.b16 %v721, %v720
      %v734 = vpack.c.b16 %v723, %v722
      %v735 = vpack.c.b16 %v725, %v724
      %v736 = vpack.c.b16 %v727, %v726
      %v737 = vpack.c.b16 %v729, %v728
      %746 = vmatpush.bf16.msra.mxu0 %v737
      %747 = vmatpush.bf16.msra.mxu0 %v736
      %748 = vmatpush.bf16.msra.mxu0 %v735
      %749 = vmatpush.bf16.msra.mxu0 %v734
      %750 = vmatpush.bf16.msra.mxu0 %v733
      %751 = vmatpush.bf16.msra.mxu0 %v732
      %752 = vmatpush.bf16.msra.mxu0 %v731
      %753 = vmatpush.bf16.msra.mxu0 %v730
      %754 = vmatmul.bf16.gmra.mxu0 %v677
      %v755 = vpop.f32.mrf.mxu0
      %v756 = vadd.f32 %v696, %v755
      %v757 = vpop.f32.mrf.mxu0
      %758 = vdwg.mxu0
      %759 = vst [vmem:[#allocation3] sm:$0x3] %v756
    $region29: #{timm_model_forward.1} parent=1 // pred_fallthru
      _
    // Predicated region
    $region30: #{timm_model_forward.1} parent=1 // pred_check
      _
    $region31: #{timm_model_forward.1} parent=1 // pred_check_branch
      %761 = sbr.rel (0) target = $region33
    $region32: #{timm_model_forward.1} parent=1 // pred_region
      %763 = vsyncadd [#allocation4], 0
      %s765 = sshll.u32 [#allocation3], 4
      %s766 = int_to_ptr.vmem [resolvable:$true] %s765
      %s767 = sshll.u32 %s5, 4
      %s768 = int_to_ptr.hbm [resolvable:$true] %s767
      %770 = dma.vmem_to_hbm [thread:$0]  %s766, 32, %s768, [#allocation4]
    $region33: #{timm_model_forward.1} parent=1 // pred_fallthru
      _
    // Predicated region
    $region34: #{timm_model_forward.1} parent=1 // pred_check
      _
    $region35: #{timm_model_forward.1} parent=1 // pred_check_branch
      %772 = sbr.rel (0) target = $region37
    $region36: #{timm_model_forward.1} parent=1 // pred_region
      %774 = dma.done [#allocation4], 32
    $region37: #{timm_model_forward.1} parent=1 // pred_fallthru
      _
    %775 = vsyncpa [#allocation4], 1

</llo_original>
